<compile_context>
chip_gen: v5e
topology: v5e:2x2
jax: 0.10.0
libtpu: 0.0.40
codegen_flags: <defaults>
</compile_context>

<pallas_src>
import jax
import jax.numpy as jnp
from jax.experimental import pallas as pl
from jax.experimental.pallas import tpu as pltpu


# ----------------------------------------------------------------------------
# Helpers
# ----------------------------------------------------------------------------
def _round_up(x, m):
    return ((x + m - 1) // m) * m


def _cdiv(a, b):
    return (a + b - 1) // b


def _vmem_capacity_bytes():
    try:
        return int(pltpu.get_tpu_info().vmem_capacity_bytes)
    except Exception:
        return 64 << 20  # v7x per-TensorCore capacity: safe lower bound


def _vmem_budget():
    cap = _vmem_capacity_bytes()
    # Leave fixed headroom for Mosaic-internal scratch; size tiles against a
    # single ~85% margin of the requested limit (review: no stacked hedges).
    vmem_limit = max(32 << 20, cap - (16 << 20))
    return vmem_limit, (vmem_limit * 85) // 100


def _choose_batch_tile(B, per_row_bytes, fixed_bytes, budget_bytes):
    """Largest multiple-of-8 batch tile (<=1024) whose pipelined working set
    fits VMEM, then shrunk so the batch grid has >= 2 steps whenever the batch
    allows it (megacore sharding on v7x + DMA/compute overlap)."""
    tb = 1024
    while tb > 8 and fixed_bytes + tb * per_row_bytes > budget_bytes:
        tb //= 2
    tb = max(8, tb)
    n_steps = max(_cdiv(B, tb), 2 if B > 8 else 1)
    return min(tb, max(8, _round_up(_cdiv(B, n_steps), 8)))


# ----------------------------------------------------------------------------
# Kernels
# ----------------------------------------------------------------------------
def _gate_kernel(x_ref, wg_ref, bg_ref, wo_ref, bo_ref, o_ref):
    """Gated expert pooling + output projection for one batch tile.

    x_ref  : (TB, E*D)  lane-flattened expert embeddings (input dtype)
    wg_ref : (E*D, E)   gate weight (natural layout)
    bg_ref : (1, E)     gate bias (f32)
    wo_ref : (D, Np)    output projection weight (lane-dense / padded N)
    bo_ref : (1, Np)    output projection bias (f32)
    o_ref  : (TB, Np)   output tile
    """
    n_exp = wg_ref.shape[1]
    d = wo_ref.shape[0]

    # Gate logits: one MXU contraction with K = E*D (f32 accumulation) instead
    # of E pushes of K=D / N=E.
    logits = jnp.dot(x_ref[...], wg_ref[...],
                     preferred_element_type=jnp.float32) + bg_ref[...]

    # Numerically stable softmax over the expert axis; denominator via the EUP
    # approximate reciprocal (frees the VPU slot).  Low-order bits differ from
    # the PyTorch reference; use approx=False if bit-parity is required.
    logits = logits - jnp.max(logits, axis=-1, keepdims=True)
    p = jnp.exp(logits)
    w = p * pl.reciprocal(jnp.sum(p, axis=-1, keepdims=True), approx=True)

    # Weighted expert mix, unrolled over E (tiny): static lane slices of the
    # flattened x, only a (TB, D) f32 accumulator is live.
    # TODO(synk): if n_exps grows beyond ~8, replace with a single MXU
    #             contraction of w against expert-stacked x instead of E
    #             lane-extract + broadcast FMAs.
    pooled = w[:, 0:1] * x_ref[:, 0:d].astype(jnp.float32)
    for e in range(1, n_exp):
        pooled = pooled + w[:, e:e + 1] * x_ref[:, e * d:(e + 1) * d].astype(jnp.float32)

    # Output projection (MXU, f32 accumulation), lane-dense store.
    # TODO(synk): if in_dim*out_dim outgrows a few MiB (v7x: 64 MiB VMEM), tile
    #             this over extra N/K grid axes with a pl.when-initialized f32
    #             accumulator instead of a resident (D, Np) weight.
    out = jnp.dot(pooled.astype(wo_ref.dtype), wo_ref[...],
                  preferred_element_type=jnp.float32) + bo_ref[...]
    o_ref[...] = out.astype(o_ref.dtype)


def _wfree_kernel(x_ref, o_ref):
    """Weight-free pooling: mean over the expert axis, one batch tile.

    x_ref: (TB, E*D) lane-flattened, o_ref: (TB, D).
    TODO(synk): a bare mean is already at HBM roofline under XLA; keep this
                kernel only where it fuses with adjacent Pallas work.
    """
    d = o_ref.shape[1]
    n_exp = x_ref.shape[1] // d
    acc = x_ref[:, 0:d].astype(jnp.float32)
    for e in range(1, n_exp):
        acc = acc + x_ref[:, e * d:(e + 1) * d].astype(jnp.float32)
    o_ref[...] = (acc * (1.0 / n_exp)).astype(o_ref.dtype)


# ----------------------------------------------------------------------------
# Wrappers
# ----------------------------------------------------------------------------
def gate_pooling(x, wg, bg, wo, bo):
    B, E, D = x.shape
    K = E * D
    N = wo.shape[1]
    isz = jnp.dtype(x.dtype).itemsize

    # Lane-dense output: pad out_dim up to a multiple of 128 (sliced back
    # below); the padded weight/bias are tiny, the win is unmasked stores.
    Np = _round_up(N, 128)
    wo_p = wo if Np == N else jnp.pad(wo, ((0, 0), (0, Np - N)))
    bo_p = bo if Np == N else jnp.pad(bo, (0, Np - N))

    # Lane-flatten x; keep the input dtype end-to-end (bf16 stays bf16).
    # NOTE: this reshape is an XLA relayout (one extra HBM round-trip of x) if
    # the producer emits (B, E, D); emit (B, E*D) upstream to avoid it.
    x2 = x.reshape(B, K)
    wg_c = wg.astype(x.dtype)
    wo_c = wo_p.astype(x.dtype)
    bg2 = bg.reshape(1, E).astype(jnp.float32)
    bo2 = bo_p.reshape(1, Np).astype(jnp.float32)

    vmem_limit, budget = _vmem_budget()
    Kp = _round_up(K, 128)
    Dp = _round_up(D, 128)
    # Per-batch-row VMEM (layout-padded): double-buffered x and output blocks
    # plus the in-kernel f32 temporaries (logits/p/w, pooled, projected out).
    per_row = (2 * Kp * isz + 2 * Np * isz
               + (3 * 128 + Dp + Np) * 4 + Dp * isz)
    # Grid-invariant weight/bias blocks (double-buffered by the default
    # pipeline; see TODO above about pl.Buffered(1) on v7x for large weights).
    fixed = (2 * _round_up(K, 8) * _round_up(E, 128) * isz
             + 2 * _round_up(D, 8) * Np * isz
             + 2 * 8 * 128 * 4 + 2 * 8 * Np * 4)
    tb = _choose_batch_tile(B, per_row, fixed, budget)

    Bp = _round_up(B, tb)
    x2 = x2 if Bp == B else jnp.pad(x2, ((0, Bp - B), (0, 0)))

    out = pl.pallas_call(
        _gate_kernel,
        out_shape=jax.ShapeDtypeStruct((Bp, Np), x.dtype),
        grid=(Bp // tb,),
        in_specs=[
            pl.BlockSpec((tb, K), lambda i: (i, 0)),    # batch-tiled, dense x
            pl.BlockSpec((K, E), lambda i: (0, 0)),     # resident gate weight
            pl.BlockSpec((1, E), lambda i: (0, 0)),
            pl.BlockSpec((D, Np), lambda i: (0, 0)),    # resident projection
            pl.BlockSpec((1, Np), lambda i: (0, 0)),
        ],
        out_specs=pl.BlockSpec((tb, Np), lambda i: (i, 0)),
        compiler_params=pltpu.CompilerParams(
            dimension_semantics=("parallel",),
            vmem_limit_bytes=vmem_limit,
        ),
    )(x2, wg_c, bg2, wo_c, bo2)
    return out[:B, :N]


def wfree_pooling(x):
    B, E, D = x.shape
    K = E * D
    isz = jnp.dtype(x.dtype).itemsize

    x2 = x.reshape(B, K)   # same lane-flattened layout as the gate path

    vmem_limit, budget = _vmem_budget()
    Kp = _round_up(K, 128)
    Dp = _round_up(D, 128)
    per_row = 2 * Kp * isz + 2 * Dp * isz + Dp * 4
    tb = _choose_batch_tile(B, per_row, 0, budget)

    Bp = _round_up(B, tb)
    x2 = x2 if Bp == B else jnp.pad(x2, ((0, Bp - B), (0, 0)))

    out = pl.pallas_call(
        _wfree_kernel,
        out_shape=jax.ShapeDtypeStruct((Bp, D), x.dtype),
        grid=(Bp // tb,),
        in_specs=[pl.BlockSpec((tb, K), lambda i: (i, 0))],
        out_specs=pl.BlockSpec((tb, D), lambda i: (i, 0)),
        compiler_params=pltpu.CompilerParams(
            dimension_semantics=("parallel",),
            vmem_limit_bytes=vmem_limit,
        ),
    )(x2)
    return out[:B]


class MPoolingLayer:
    """JAX/Pallas port of models/ANT.py::MPoolingLayer."""

    def __init__(self, mode, config, in_dim, out_dim, n_exps, key):
        self.mode = mode
        if mode == 'gate':
            k1, k2, k3, k4 = jax.random.split(key, 4)
            scale_g = 1.0 / jnp.sqrt(jnp.float32(in_dim * n_exps))
            scale_o = 1.0 / jnp.sqrt(jnp.float32(in_dim))
            self.wg = jax.random.uniform(k1, (in_dim * n_exps, n_exps),
                                         jnp.float32, -scale_g, scale_g)
            self.bg = jax.random.uniform(k2, (n_exps,), jnp.float32,
                                         -scale_g, scale_g)
            self.wo = jax.random.uniform(k3, (in_dim, out_dim),
                                         jnp.float32, -scale_o, scale_o)
            self.bo = jax.random.uniform(k4, (out_dim,), jnp.float32,
                                         -scale_o, scale_o)
        elif mode == 'WFree':
            pass
        else:
            raise NotImplementedError

    def __call__(self, x, xo=None):
        if self.mode == 'gate':
            return gate_pooling(x, self.wg, self.bg, self.wo, self.bo)
        return wfree_pooling(x)


# Pure-JAX reference for correctness checking.
def _gate_ref(x, wg, bg, wo, bo):
    B, E, D = x.shape
    logits = x.reshape(B, E * D) @ wg + bg
    w = jax.nn.softmax(logits, axis=-1)
    pooled = jnp.einsum('be,bed->bd', w, x)
    return pooled @ wo + bo


if __name__ == "__main__":
    key = jax.random.PRNGKey(0)
    kx, kx2, kp = jax.random.split(key, 3)

    B, E, D, N = 8, 4, 32, 32          # batch, n_exps, in_dim, out_dim
    x = jax.random.normal(kx, (B, E, D), jnp.float32)

    # gate mode
    layer = MPoolingLayer('gate', config=None, in_dim=D, out_dim=N,
                          n_exps=E, key=kp)
    out = jax.block_until_ready(layer(x))
    ref = _gate_ref(x, layer.wg, layer.bg, layer.wo, layer.bo)
    assert out.shape == (B, N)
    # approx=True reciprocal in the softmax denominator changes low-order bits.
    assert jnp.allclose(out, ref, atol=2e-3, rtol=2e-3)

    # gate mode, ragged batch (exercises batch padding / multi-step grid path)
    x_ragged = jax.random.normal(kx2, (10, E, D), jnp.float32)
    out_r = jax.block_until_ready(layer(x_ragged))
    ref_r = _gate_ref(x_ragged, layer.wg, layer.bg, layer.wo, layer.bo)
    assert out_r.shape == (10, N)
    assert jnp.allclose(out_r, ref_r, atol=2e-3, rtol=2e-3)

    # WFree mode
    layer_wf = MPoolingLayer('WFree', config=None, in_dim=D, out_dim=D,
                             n_exps=E, key=kp)
    out_wf = jax.block_until_ready(layer_wf(x))
    assert out_wf.shape == (B, D)
    assert jnp.allclose(out_wf, jnp.mean(x, axis=1), atol=1e-5, rtol=1e-5)

    print("KERNEL_OK")
</pallas_src>

<mosaic_0001>
module attributes {stable_mosaic.version = 11 : i64} {
  func.func @_gate_kernel(%arg0: i32, %arg1: memref<8x128xf32, #tpu.memory_space<vmem>>, %arg2: memref<128x4xf32, #tpu.memory_space<vmem>>, %arg3: memref<1x4xf32, #tpu.memory_space<vmem>>, %arg4: memref<32x128xf32, #tpu.memory_space<vmem>>, %arg5: memref<1x128xf32, #tpu.memory_space<vmem>>, %arg6: memref<8x128xf32, #tpu.memory_space<vmem>>) attributes {dimension_semantics = [#tpu.dimension_semantics<parallel>], iteration_bounds = array<i64: 1>, scalar_prefetch = 0 : i64, scratch_operands = 0 : i64, tpu.core_type = #tpu.core_type<tc>, window_params = [{transform_indices = @transform_0, window_bounds = array<i64: 8, 128>}, {pipeline_mode = #tpu.pipeline_mode<synchronous>, transform_indices = @transform_1, window_bounds = array<i64: 128, 4>}, {pipeline_mode = #tpu.pipeline_mode<synchronous>, transform_indices = @transform_2, window_bounds = array<i64: 1, 4>}, {pipeline_mode = #tpu.pipeline_mode<synchronous>, transform_indices = @transform_3, window_bounds = array<i64: 32, 128>}, {pipeline_mode = #tpu.pipeline_mode<synchronous>, transform_indices = @transform_4, window_bounds = array<i64: 1, 128>}, {transform_indices = @transform_5, window_bounds = array<i64: 8, 128>}]} {
    %c0 = arith.constant 0 : index
    %c0_0 = arith.constant 0 : index
    %0 = vector.load %arg1[%c0, %c0_0] : memref<8x128xf32, #tpu.memory_space<vmem>>, vector<8x128xf32>
    %c0_1 = arith.constant 0 : index
    %c0_2 = arith.constant 0 : index
    %1 = vector.load %arg2[%c0_1, %c0_2] : memref<128x4xf32, #tpu.memory_space<vmem>>, vector<128x4xf32>
    %cst = arith.constant dense<0.000000e+00> : vector<8x4xf32>
    %2 = tpu.matmul %0, %1, %cst {dimension_numbers = #tpu.dot_dimension_numbers<[1], [0], [0], [1], [0, 0, 1, 1], [], []>} : vector<8x128xf32>, vector<128x4xf32>, vector<8x4xf32> -> vector<8x4xf32>
    %c0_3 = arith.constant 0 : index
    %c0_4 = arith.constant 0 : index
    %3 = vector.load %arg3[%c0_3, %c0_4] : memref<1x4xf32, #tpu.memory_space<vmem>>, vector<1x4xf32>
    %4 = vector.broadcast %3 : vector<1x4xf32> to vector<8x4xf32>
    %5 = arith.addf %2, %4 : vector<8x4xf32>
    %cst_5 = arith.constant dense<0xFF800000> : vector<8xf32>
    %6 = vector.multi_reduction <maximumf>, %5, %cst_5 [1] : vector<8x4xf32> to vector<8xf32>
    %7 = vector.shape_cast %6 : vector<8xf32> to vector<8x1xf32>
    %8 = vector.broadcast %7 : vector<8x1xf32> to vector<8x4xf32>
    %9 = arith.subf %5, %8 : vector<8x4xf32>
    %10 = math.exp %9 : vector<8x4xf32>
    %cst_6 = arith.constant dense<0.000000e+00> : vector<8xf32>
    %11 = vector.multi_reduction <add>, %10, %cst_6 [1] : vector<8x4xf32> to vector<8xf32>
    %12 = vector.shape_cast %11 : vector<8xf32> to vector<8x1xf32>
    %13 = tpu.reciprocal %12 {approx = true} : vector<8x1xf32> -> vector<8x1xf32>
    %14 = vector.broadcast %13 : vector<8x1xf32> to vector<8x4xf32>
    %15 = arith.mulf %10, %14 : vector<8x4xf32>
    %16 = vector.extract_strided_slice %15 {offsets = [0, 0], sizes = [8, 1], strides = [1, 1]} : vector<8x4xf32> to vector<8x1xf32>
    %c0_7 = arith.constant 0 : index
    %c0_8 = arith.constant 0 : index
    %17 = vector.load %arg1[%c0_7, %c0_8] : memref<8x128xf32, #tpu.memory_space<vmem>>, vector<8x32xf32>
    %18 = vector.broadcast %16 : vector<8x1xf32> to vector<8x32xf32>
    %19 = arith.mulf %18, %17 : vector<8x32xf32>
    %20 = vector.extract_strided_slice %15 {offsets = [0, 1], sizes = [8, 1], strides = [1, 1]} : vector<8x4xf32> to vector<8x1xf32>
    %c0_9 = arith.constant 0 : index
    %c32 = arith.constant 32 : index
    %21 = vector.load %arg1[%c0_9, %c32] : memref<8x128xf32, #tpu.memory_space<vmem>>, vector<8x32xf32>
    %22 = vector.broadcast %20 : vector<8x1xf32> to vector<8x32xf32>
    %23 = arith.mulf %22, %21 : vector<8x32xf32>
    %24 = arith.addf %19, %23 : vector<8x32xf32>
    %25 = vector.extract_strided_slice %15 {offsets = [0, 2], sizes = [8, 1], strides = [1, 1]} : vector<8x4xf32> to vector<8x1xf32>
    %c0_10 = arith.constant 0 : index
    %c64 = arith.constant 64 : index
    %26 = vector.load %arg1[%c0_10, %c64] : memref<8x128xf32, #tpu.memory_space<vmem>>, vector<8x32xf32>
    %27 = vector.broadcast %25 : vector<8x1xf32> to vector<8x32xf32>
    %28 = arith.mulf %27, %26 : vector<8x32xf32>
    %29 = arith.addf %24, %28 : vector<8x32xf32>
    %30 = vector.extract_strided_slice %15 {offsets = [0, 3], sizes = [8, 1], strides = [1, 1]} : vector<8x4xf32> to vector<8x1xf32>
    %c0_11 = arith.constant 0 : index
    %c96 = arith.constant 96 : index
    %31 = vector.load %arg1[%c0_11, %c96] : memref<8x128xf32, #tpu.memory_space<vmem>>, vector<8x32xf32>
    %32 = vector.broadcast %30 : vector<8x1xf32> to vector<8x32xf32>
    %33 = arith.mulf %32, %31 : vector<8x32xf32>
    %34 = arith.addf %29, %33 : vector<8x32xf32>
    %c0_12 = arith.constant 0 : index
    %c0_13 = arith.constant 0 : index
    %35 = vector.load %arg4[%c0_12, %c0_13] : memref<32x128xf32, #tpu.memory_space<vmem>>, vector<32x128xf32>
    %cst_14 = arith.constant dense<0.000000e+00> : vector<8x128xf32>
    %36 = tpu.matmul %34, %35, %cst_14 {dimension_numbers = #tpu.dot_dimension_numbers<[1], [0], [0], [1], [0, 0, 1, 1], [], []>} : vector<8x32xf32>, vector<32x128xf32>, vector<8x128xf32> -> vector<8x128xf32>
    %c0_15 = arith.constant 0 : index
    %c0_16 = arith.constant 0 : index
    %37 = vector.load %arg5[%c0_15, %c0_16] : memref<1x128xf32, #tpu.memory_space<vmem>>, vector<1x128xf32>
    %38 = vector.broadcast %37 : vector<1x128xf32> to vector<8x128xf32>
    %39 = arith.addf %36, %38 : vector<8x128xf32>
    %c0_17 = arith.constant 0 : index
    %c0_18 = arith.constant 0 : index
    %40 = vector.load %arg6[%c0_17, %c0_18] : memref<8x128xf32, #tpu.memory_space<vmem>>, vector<8x128xf32>
    tpu.vector_store %arg6[%c0_17, %c0_18], %39 {strides = array<i32>} : memref<8x128xf32, #tpu.memory_space<vmem>>, vector<8x128xf32>,
    return
  }
  func.func @transform_0(%arg0: i32) -> (i32, i32) {
    %c0_i32 = arith.constant 0 : i32
    %c0_i32_0 = arith.constant 0 : i32
    return %arg0, %c0_i32 : i32, i32
  }
  func.func @transform_1(%arg0: i32) -> (i32, i32) {
    %c0_i32 = arith.constant 0 : i32
    %c0_i32_0 = arith.constant 0 : i32
    %c0_i32_1 = arith.constant 0 : i32
    return %c0_i32, %c0_i32_0 : i32, i32
  }
  func.func @transform_2(%arg0: i32) -> (i32, i32) {
    %c0_i32 = arith.constant 0 : i32
    %c0_i32_0 = arith.constant 0 : i32
    %c0_i32_1 = arith.constant 0 : i32
    return %c0_i32, %c0_i32_0 : i32, i32
  }
  func.func @transform_3(%arg0: i32) -> (i32, i32) {
    %c0_i32 = arith.constant 0 : i32
    %c0_i32_0 = arith.constant 0 : i32
    %c0_i32_1 = arith.constant 0 : i32
    return %c0_i32, %c0_i32_0 : i32, i32
  }
  func.func @transform_4(%arg0: i32) -> (i32, i32) {
    %c0_i32 = arith.constant 0 : i32
    %c0_i32_0 = arith.constant 0 : i32
    %c0_i32_1 = arith.constant 0 : i32
    return %c0_i32, %c0_i32_0 : i32, i32
  }
  func.func @transform_5(%arg0: i32) -> (i32, i32) {
    %c0_i32 = arith.constant 0 : i32
    %c0_i32_0 = arith.constant 0 : i32
    return %arg0, %c0_i32 : i32, i32
  }
}

</mosaic_0001>

<llo_original>
// kernel: tpu_custom_call.1
$region0: #{tpu_custom_call.1}
  #allocation0 [shape = 'u32[]', space=smem, size = 0x4, offset = 0x4, fixed_abs, tag = 'smem constant byte address 0x4 - core index']
  #allocation1 [shape = 'u32[72,128]{1,0:T(1,128)}', space=vmem, size = 0x9000, scoped, tag = 'internal scratch']
  %s0 = inlined_call_operand.vmem [shape: f32[8,128], index: 0, kind: input, shape index: {}]
  %s1 = inlined_call_operand.vmem [shape: f32[128,4], index: 1, kind: input, shape index: {}]
  %s2 = inlined_call_operand.vmem [shape: f32[1,4], index: 2, kind: input, shape index: {}]
  %s3 = inlined_call_operand.vmem [shape: f32[32,128], index: 3, kind: input, shape index: {}]
  %s4 = inlined_call_operand.vmem [shape: f32[1,128], index: 4, kind: input, shape index: {}]
  %s5 = inlined_call_operand.hbm [shape: f32[8,128], index: 5, kind: output, shape index: {}]
  %s6 = sld [smem:[#allocation0]]
  $region30: #{tpu_custom_call.1} parent=0
    _
  %s8 = ssub.s32 1, %s6
  %s9 = scalar_select 0, %s8, %s6
  $region1: #{tpu_custom_call.1} parent=0
    #allocation2 [shape = 'u8[4096]{0}', space=vmem, size = 0x1000, scoped, tag = 'output window, operand 0, single buffered']
    #allocation3 [shape = 's32[1]{0}', space=sflag, size = 0x4, scoped, tag = 'scoped memory for tpu_custom_call.1']
    %10 = vsyncpa [#allocation3], 0
    // Predicated region
    $region2: #{tpu_custom_call.1} parent=1 // pred_check
      _
    $region3: #{tpu_custom_call.1} parent=1 // pred_check_branch
      %12 = sbr.rel (0) target = $region5
    $region4: #{tpu_custom_call.1} parent=1 // pred_region
      _
    $region5: #{tpu_custom_call.1} parent=1 // pred_fallthru
      _
    // Predicated region
    $region6: #{tpu_custom_call.1} parent=1 // pred_check
      _
    $region7: #{tpu_custom_call.1} parent=1 // pred_check_branch
      %14 = sbr.rel (0) target = $region9
    $region8: #{tpu_custom_call.1} parent=1 // pred_region
      _
    $region9: #{tpu_custom_call.1} parent=1 // pred_fallthru
      _
    // Predicated region
    $region10: #{tpu_custom_call.1} parent=1 // pred_check
      _
    $region11: #{tpu_custom_call.1} parent=1 // pred_check_branch
      %16 = sbr.rel (0) target = $region13
    $region12: #{tpu_custom_call.1} parent=1 // pred_region
      _
    $region13: #{tpu_custom_call.1} parent=1 // pred_fallthru
      _
    // Predicated region
    $region14: #{tpu_custom_call.1} parent=1 // pred_check
      _
    $region15: #{tpu_custom_call.1} parent=1 // pred_check_branch
      %18 = sbr.rel (0) target = $region17
    $region16: #{tpu_custom_call.1} parent=1 // pred_region
      _
    $region17: #{tpu_custom_call.1} parent=1 // pred_fallthru
      _
    // Predicated region
    $region18: #{tpu_custom_call.1} parent=1 // pred_check
      _
    $region19: #{tpu_custom_call.1} parent=1 // pred_check_branch
      %20 = sbr.rel (0) target = $region21
    $region20: #{tpu_custom_call.1} parent=1 // pred_region
      _
    $region21: #{tpu_custom_call.1} parent=1 // pred_fallthru
      _
    %v21 = vld [vmem:[%s0] sm:$0xff]
    %v22 = vld [vmem:[%s1] sm:$0xff]
    %v23 = vld [vmem:[%s1 + $0x8] sm:$0xff]
    %v24 = vld [vmem:[%s1 + $0x10] sm:$0xff]
    %v25 = vld [vmem:[%s1 + $0x18] sm:$0xff]
    %v26 = vld [vmem:[%s1 + $0x20] sm:$0xff]
    %v27 = vld [vmem:[%s1 + $0x28] sm:$0xff]
    %v28 = vld [vmem:[%s1 + $0x30] sm:$0xff]
    %v29 = vld [vmem:[%s1 + $0x38] sm:$0xff]
    %v30 = vld [vmem:[%s1 + $0x40] sm:$0xff]
    %v31 = vld [vmem:[%s1 + $0x48] sm:$0xff]
    %v32 = vld [vmem:[%s1 + $0x50] sm:$0xff]
    %v33 = vld [vmem:[%s1 + $0x58] sm:$0xff]
    %v34 = vld [vmem:[%s1 + $0x60] sm:$0xff]
    %v35 = vld [vmem:[%s1 + $0x68] sm:$0xff]
    %v36 = vld [vmem:[%s1 + $0x70] sm:$0xff]
    %v37 = vld [vmem:[%s1 + $0x78] sm:$0xff]
    %v38 = vld [vmem:[%s2] sm:$0x1]
    %v40 = vperm.slane %v38, 0
    %42 = vmatpush.msra.mxu0 %v37
    %43 = vmatpush.msra.mxu0 %v36
    %44 = vmatpush.msra.mxu0 %v35
    %45 = vmatpush.msra.mxu0 %v34
    %46 = vmatpush.msra.mxu0 %v33
    %47 = vmatpush.msra.mxu0 %v32
    %48 = vmatpush.msra.mxu0 %v31
    %49 = vmatpush.msra.mxu0 %v30
    %50 = vmatpush.msra.mxu0 %v29
    %51 = vmatpush.msra.mxu0 %v28
    %52 = vmatpush.msra.mxu0 %v27
    %53 = vmatpush.msra.mxu0 %v26
    %54 = vmatpush.msra.mxu0 %v25
    %55 = vmatpush.msra.mxu0 %v24
    %56 = vmatpush.msra.mxu0 %v23
    %57 = vmatpush.msra.mxu0 %v22
    %58 = vmatmul.f32.gmra.mxu0 %v21
    %v59 = vpop.f32.mrf.mxu0
    %v60 = vadd.f32 %v40, %v59
    %61 = vdwg.mxu0
    %vm62 = vcmask 31744
    %v63 = vsel %vm62, %v60, -inf
    %64 = vmax.xlane.f32.xlu0 %v63
    %v65 = vpop.xlane.xlu0 %64
    %v66 = vsub.f32 %v60, %v65
    %v67 = vmul.f32 %v66, 1.442695
    %v68 = vpow.pop %v67
    %v69 = vsel %vm62, %v68, 0.0
    %70 = vadd.xlane.f32.xlu0 %v69
    %v71 = vpop.xlane.xlu0 %70
    %v72 = vrcp.pop %v71
    %v73 = vmul.f32 %v68, %v72
    %75 = vset.pattern.permute.xlu0 0
    %76 = vperm.xlu0 %75, %v73
    %v77 = vpop.permute.xlu0 %76
    %v79 = vmul.f32 %v77, %v21
    %80 = vset.pattern.permute.xlu0 1
    %81 = vperm.xlu0 %80, %v73
    %v82 = vpop.permute.xlu0 %81
    %v84 = vmul.f32 %v82, %v21
    %86 = vrot.lane.b32.xlu0 %v84, 96
    %v87 = vpop.permute.xlu0 %86
    %v89 = vadd.f32 %v79, %v87
    %90 = vset.pattern.permute.xlu0 2
    %91 = vperm.xlu0 %90, %v73
    %v92 = vpop.permute.xlu0 %91
    %v94 = vmul.f32 %v92, %v21
    %96 = vrot.lane.b32.xlu0 %v94, 64
    %v97 = vpop.permute.xlu0 %96
    %v99 = vadd.f32 %v89, %v97
    %100 = vset.pattern.permute.xlu0 3
    %101 = vperm.xlu0 %100, %v73
    %v102 = vpop.permute.xlu0 %101
    %v104 = vmul.f32 %v102, %v21
    %106 = vrot.lane.b32.xlu0 %v104, 32
    %v107 = vpop.permute.xlu0 %106
    %v109 = vadd.f32 %v99, %v107
    %v110 = vld [vmem:[%s3] sm:$0xff]
    %v111 = vld [vmem:[%s3 + $0x8] sm:$0xff]
    %v112 = vld [vmem:[%s3 + $0x10] sm:$0xff]
    %v113 = vld [vmem:[%s3 + $0x18] sm:$0xff]
    %v114 = vld [vmem:[%s4] sm:$0x1]
    %v116 = vperm.slane %v114, 0
    %vm118 = vcmask 261120
    %v120 = vsel %vm118, %v109, 0
    %122 = vmatpush.msra.mxu0 0.0
    %123 = vmatpush.msra.mxu0 0.0
    %124 = vmatpush.msra.mxu0 0.0
    %125 = vmatpush.msra.mxu0 0.0
    %126 = vmatpush.msra.mxu0 0.0
    %127 = vmatpush.msra.mxu0 0.0
    %128 = vmatpush.msra.mxu0 0.0
    %129 = vmatpush.msra.mxu0 0.0
    %130 = vmatpush.msra.mxu0 0.0
    %131 = vmatpush.msra.mxu0 0.0
    %132 = vmatpush.msra.mxu0 0.0
    %133 = vmatpush.msra.mxu0 0.0
    %134 = vmatpush.msra.mxu0 %v113
    %135 = vmatpush.msra.mxu0 %v112
    %136 = vmatpush.msra.mxu0 %v111
    %137 = vmatpush.msra.mxu0 %v110
    %138 = vmatmul.f32.gmra.mxu0 %v120
    %v139 = vpop.f32.mrf.mxu0
    %v140 = vadd.f32 %v116, %v139
    %141 = vdwg.mxu0
    %142 = vst [vmem:[#allocation2] sm:$0xff] %v140
    // Predicated region
    $region22: #{tpu_custom_call.1} parent=1 // pred_check
      _
    $region23: #{tpu_custom_call.1} parent=1 // pred_check_branch
      %144 = sbr.rel (0) target = $region25
    $region24: #{tpu_custom_call.1} parent=1 // pred_region
      %146 = vsyncadd [#allocation3], 0
      %s148 = sshll.u32 [#allocation2], 4
      %s149 = int_to_ptr.vmem [resolvable:$true] %s148
      %s150 = sshll.u32 %s5, 4
      %s151 = int_to_ptr.hbm [resolvable:$true] %s150
      %153 = dma.vmem_to_hbm [thread:$0]  %s149, 128, %s151, [#allocation3]
    $region25: #{tpu_custom_call.1} parent=1 // pred_fallthru
      _
    // Predicated region
    $region26: #{tpu_custom_call.1} parent=1 // pred_check
      _
    $region27: #{tpu_custom_call.1} parent=1 // pred_check_branch
      %155 = sbr.rel (0) target = $region29
    $region28: #{tpu_custom_call.1} parent=1 // pred_region
      %157 = dma.done [#allocation3], 128
    $region29: #{tpu_custom_call.1} parent=1 // pred_fallthru
      _
    %158 = vsyncpa [#allocation3], 1

</llo_original>
